<compile_context>
chip_gen: v5e
topology: v5e:2x2
jax: 0.10.0
libtpu: 0.0.40
codegen_flags: <defaults>
</compile_context>

<pallas_src>
import functools

import jax
import jax.numpy as jnp
import numpy as np
from jax.experimental import pallas as pl
from jax.experimental.pallas import tpu as pltpu


def _round_up(x, m):
    return ((x + m - 1) // m) * m


def _physical_vmem_bytes():
    """Per-core VMEM capacity (64 MiB on v7x, 128 MiB on v5e/v6e)."""
    try:
        return int(pltpu.get_tpu_info().vmem_capacity_bytes)
    except Exception:  # conservative fallback (v7x per-TC VMEM)
        return 64 * 1024 * 1024


def _grouped_linear_kernel(x_ref, w_ref, b_ref, o_ref):
    # x_ref: (tb, d_max)         gathered inputs for this group's columns
    # w_ref: (1, d_max, j_max)   pre-transposed, zero-padded weight  (in, out)
    # b_ref: (1, 1, j_max)       zero-padded bias (f32)
    # o_ref: (tb, j_max)
    acc = jnp.dot(x_ref[...], w_ref[0],
                  preferred_element_type=jnp.float32)       # MXU, f32 accumulate
    o_ref[...] = (acc + b_ref[0]).astype(o_ref.dtype)


@functools.partial(
    jax.jit,
    static_argnames=("arrangements", "j_ranks", "compute_dtype", "tile_b"))
def grouped_linear_forward(x, weights, biases, *, arrangements, j_ranks,
                           compute_dtype=jnp.float32, tile_b=1024):
    """Pallas implementation of GroupedLinear.forward.

    x        : [B, F]
    weights  : tuple, weights[i] has shape [j_ranks[i], len(arrangements[i])]
    biases   : tuple, biases[i] has shape [j_ranks[i]]
    returns  : [B, sum(j_ranks)]  (x.dtype)
    """
    B, F = x.shape
    G = len(arrangements)
    d_sizes = [len(a) for a in arrangements]

    # Common padded tile sizes (128-lane aligned only).
    d_max = _round_up(max(d_sizes), 128)
    j_max = _round_up(max(j_ranks), 128)

    cbytes = np.dtype(compute_dtype).itemsize
    obytes = np.dtype(x.dtype).itemsize
    sublane = 16 if cbytes == 2 else 8

    # --- tile_b derived from the VMEM budget (critical on v7x: 64 MiB/TC). ---
    phys_vmem = _physical_vmem_bytes()
    budget = phys_vmem // 2
    fixed = 2 * (d_max * j_max * cbytes + j_max * 4)          # w + bias (dbl-buf)
    per_row = 2 * (d_max * cbytes + j_max * obytes)           # x + out (dbl-buf)
    tb_budget = max(sublane, (budget - fixed) // per_row)
    tb = min(int(tile_b), int(tb_budget), _round_up(B, sublane))
    tb = max(sublane, (tb // sublane) * sublane)
    nb = pl.cdiv(B, tb)

    vmem_est = fixed + tb * per_row
    vmem_limit = int(min(int(0.85 * phys_vmem),
                         max(32 * 1024 * 1024, 2 * vmem_est,
                             vmem_est + (1 << 20))))

    # --- glue: ONE fused column gather into a packed [B, G*d_max] slab. ------
    # Pad slots of idx point at column 0; the zero-padded weight rows null
    # their contribution, so no appended zero column (and no concat copy).
    idx_np = np.zeros((G, d_max), dtype=np.int32)
    for g, arr in enumerate(arrangements):
        idx_np[g, :d_sizes[g]] = np.asarray(arr, dtype=np.int32)
    col_idx = jnp.asarray(idx_np.reshape(-1))                  # [G*d_max]
    x_packed = jnp.take(x.astype(compute_dtype), col_idx, axis=1)   # [B, G*d_max]

    # --- glue: pre-transposed, padded weights [G, d_max, j_max]; f32 bias. ---
    w_list, b_list = [], []
    for g in range(G):
        w_t = jnp.transpose(weights[g]).astype(compute_dtype)   # [d_g, j_g]
        w_t = jnp.pad(w_t, ((0, d_max - d_sizes[g]), (0, j_max - j_ranks[g])))
        w_list.append(w_t)
        b_g = jnp.pad(biases[g].astype(jnp.float32), (0, j_max - j_ranks[g]))
        b_list.append(b_g[None, :])                              # [1, j_max]
    wg = jnp.stack(w_list)                                       # [G, d_max, j_max]
    bg = jnp.stack(b_list)                                       # [G, 1, j_max]

    # Grid: (group, batch-tile); batch innermost so the weight block index is
    # constant across consecutive steps -> weights stay resident in VMEM.
    out_packed = pl.pallas_call(
        _grouped_linear_kernel,
        out_shape=jax.ShapeDtypeStruct((B, G * j_max), x.dtype),
        grid_spec=pltpu.PrefetchScalarGridSpec(
            num_scalar_prefetch=0,
            grid=(G, nb),
            in_specs=[
                pl.BlockSpec((tb, d_max), lambda g, b: (b, g)),
                pl.BlockSpec((1, d_max, j_max), lambda g, b: (g, 0, 0)),
                pl.BlockSpec((1, 1, j_max), lambda g, b: (g, 0, 0)),
            ],
            out_specs=pl.BlockSpec((tb, j_max), lambda g, b: (b, g)),
        ),
        compiler_params=pltpu.CompilerParams(
            dimension_semantics=("parallel", "parallel"),
            vmem_limit_bytes=vmem_limit),
    )(x_packed, wg, bg)

    # Un-pad the packed output with a single fused gather (no slices+concat).
    out_idx_np = np.concatenate(
        [g * j_max + np.arange(j_ranks[g], dtype=np.int32) for g in range(G)])
    out_idx = jnp.asarray(out_idx_np)                            # [sum(j_ranks)]
    return jnp.take(out_packed, out_idx, axis=1)


def _reference_forward(x, weights, biases, arrangements,
                       compute_dtype=jnp.float32):
    """Pure-JAX reference following the same dtype path as the kernel."""
    outs = []
    for i, arr in enumerate(arrangements):
        arr = jnp.asarray(arr, dtype=jnp.int32)
        xg = x[:, arr].astype(compute_dtype)
        wg = weights[i].astype(compute_dtype)
        y = jnp.dot(xg, wg.T, preferred_element_type=jnp.float32)
        y = y + biases[i].astype(jnp.float32)
        outs.append(y.astype(x.dtype))
    return jnp.concatenate(outs, axis=1)


if __name__ == "__main__":
    key = jax.random.PRNGKey(0)

    # Small synthetic config consistent with the module's __init__:
    # arrangements: index sets (clusters) over the input feature axis.
    B, F = 4, 16
    arrangements = (
        (0, 3, 5, 7, 9),
        (1, 2, 4, 6),
        (8, 10, 11, 12, 13, 14, 15),
    )
    j_ranks = (6, 3, 5)

    keys = jax.random.split(key, 2 * len(arrangements) + 1)
    x = jax.random.normal(keys[0], (B, F), dtype=jnp.float32)
    weights = tuple(
        jax.random.normal(keys[1 + 2 * i],
                          (j_ranks[i], len(arrangements[i])),
                          dtype=jnp.float32) * 0.1
        for i in range(len(arrangements))
    )
    biases = tuple(
        jax.random.normal(keys[2 + 2 * i], (j_ranks[i],), dtype=jnp.float32) * 0.1
        for i in range(len(arrangements))
    )

    # Default f32 compute path (matches PyTorch module): tight check.
    out_f32 = grouped_linear_forward(
        x, weights, biases, arrangements=arrangements, j_ranks=j_ranks)
    out_f32 = jax.block_until_ready(out_f32)
    ref_f32 = _reference_forward(x, weights, biases, arrangements, jnp.float32)
    np.testing.assert_allclose(np.asarray(out_f32), np.asarray(ref_f32),
                               rtol=1e-5, atol=1e-5)

    # Opt-in bf16 compute path (perf path): check against matching bf16
    # reference, and loosely against the full-f32 reference.
    out_bf16 = grouped_linear_forward(
        x, weights, biases, arrangements=arrangements, j_ranks=j_ranks,
        compute_dtype=jnp.bfloat16)
    out_bf16 = jax.block_until_ready(out_bf16)
    ref_bf16 = _reference_forward(x, weights, biases, arrangements, jnp.bfloat16)
    np.testing.assert_allclose(np.asarray(out_bf16), np.asarray(ref_bf16),
                               rtol=5e-3, atol=5e-3)
    np.testing.assert_allclose(np.asarray(out_bf16), np.asarray(ref_f32),
                               rtol=5e-2, atol=5e-2)

    assert out_f32.shape == (B, sum(j_ranks))
    assert out_bf16.shape == (B, sum(j_ranks))

    print("KERNEL_OK")
</pallas_src>

<mosaic_0001>
module attributes {stable_mosaic.version = 11 : i64} {
  func.func @_grouped_linear_kernel(%arg0: i32, %arg1: i32, %arg2: memref<8x128xf32, #tpu.memory_space<vmem>>, %arg3: memref<1x128x128xf32, #tpu.memory_space<vmem>>, %arg4: memref<1x1x128xf32, #tpu.memory_space<vmem>>, %arg5: memref<8x128xf32, #tpu.memory_space<vmem>>) attributes {dimension_semantics = [#tpu.dimension_semantics<parallel>, #tpu.dimension_semantics<parallel>], iteration_bounds = array<i64: 3, 1>, scalar_prefetch = 0 : i64, scratch_operands = 0 : i64, tpu.core_type = #tpu.core_type<tc>, window_params = [{transform_indices = @transform_0, window_bounds = array<i64: 8, 128>}, {transform_indices = @transform_1, window_bounds = array<i64: 1, 128, 128>}, {transform_indices = @transform_2, window_bounds = array<i64: 1, 1, 128>}, {transform_indices = @transform_3, window_bounds = array<i64: 8, 128>}]} {
    %c0 = arith.constant 0 : index
    %c0_0 = arith.constant 0 : index
    %0 = vector.load %arg2[%c0, %c0_0] : memref<8x128xf32, #tpu.memory_space<vmem>>, vector<8x128xf32>
    %c0_1 = arith.constant 0 : index
    %c0_2 = arith.constant 0 : index
    %c0_3 = arith.constant 0 : index
    %1 = vector.load %arg3[%c0_1, %c0_2, %c0_3] : memref<1x128x128xf32, #tpu.memory_space<vmem>>, vector<1x128x128xf32>
    %2 = vector.shape_cast %1 : vector<1x128x128xf32> to vector<128x128xf32>
    %cst = arith.constant dense<0.000000e+00> : vector<8x128xf32>
    %3 = tpu.matmul %0, %2, %cst {dimension_numbers = #tpu.dot_dimension_numbers<[1], [0], [0], [1], [0, 0, 1, 1], [], []>} : vector<8x128xf32>, vector<128x128xf32>, vector<8x128xf32> -> vector<8x128xf32>
    %c0_4 = arith.constant 0 : index
    %c0_5 = arith.constant 0 : index
    %c0_6 = arith.constant 0 : index
    %4 = vector.load %arg4[%c0_4, %c0_5, %c0_6] : memref<1x1x128xf32, #tpu.memory_space<vmem>>, vector<1x1x128xf32>
    %5 = vector.shape_cast %4 : vector<1x1x128xf32> to vector<1x128xf32>
    %6 = vector.broadcast %5 : vector<1x128xf32> to vector<8x128xf32>
    %7 = arith.addf %3, %6 : vector<8x128xf32>
    %c0_7 = arith.constant 0 : index
    %c0_8 = arith.constant 0 : index
    %8 = vector.load %arg5[%c0_7, %c0_8] : memref<8x128xf32, #tpu.memory_space<vmem>>, vector<8x128xf32>
    tpu.vector_store %arg5[%c0_7, %c0_8], %7 {strides = array<i32>} : memref<8x128xf32, #tpu.memory_space<vmem>>, vector<8x128xf32>,
    return
  }
  func.func @transform_0(%arg0: i32, %arg1: i32) -> (i32, i32) {
    %c0_i32 = arith.constant 0 : i32
    return %arg1, %arg0 : i32, i32
  }
  func.func @transform_1(%arg0: i32, %arg1: i32) -> (i32, i32, i32) {
    %c0_i32 = arith.constant 0 : i32
    %c0_i32_0 = arith.constant 0 : i32
    %c0_i32_1 = arith.constant 0 : i32
    return %arg0, %c0_i32, %c0_i32_0 : i32, i32, i32
  }
  func.func @transform_2(%arg0: i32, %arg1: i32) -> (i32, i32, i32) {
    %c0_i32 = arith.constant 0 : i32
    %c0_i32_0 = arith.constant 0 : i32
    %c0_i32_1 = arith.constant 0 : i32
    return %arg0, %c0_i32, %c0_i32_0 : i32, i32, i32
  }
  func.func @transform_3(%arg0: i32, %arg1: i32) -> (i32, i32) {
    %c0_i32 = arith.constant 0 : i32
    return %arg1, %arg0 : i32, i32
  }
}

</mosaic_0001>

<llo_original>
// kernel: grouped_linear_forward.1
$region0: #{grouped_linear_forward.1}
  #allocation0 [shape = 'u32[]', space=smem, size = 0x4, offset = 0x4, fixed_abs, tag = 'smem constant byte address 0x4 - core index']
  #allocation1 [shape = 'u32[72,128]{1,0:T(1,128)}', space=vmem, size = 0x9000, scoped, tag = 'internal scratch']
  %s0 = inlined_call_operand.vmem [shape: f32[4,384], index: 0, kind: input, shape index: {}]
  %s1 = inlined_call_operand.vmem [shape: f32[3,128,128], index: 1, kind: input, shape index: {}]
  %s2 = inlined_call_operand.vmem [shape: f32[3,1,128], index: 2, kind: input, shape index: {}]
  %s3 = inlined_call_operand.vmem [shape: f32[4,384], index: 3, kind: output, shape index: {}]
  %s4 = sld [smem:[#allocation0]]
  $region109: #{grouped_linear_forward.1} parent=0
    _
  %s6 = ssub.s32 1, %s4
  %s7 = scalar_select 0, %s6, %s4
  $region1: #{grouped_linear_forward.1} parent=0
    #allocation2 [shape = 'u8[8192]{0}', space=vmem, size = 0x2000, scoped, tag = 'input window, operand 0']
    #allocation3 [shape = 'u8[8192]{0}', space=vmem, size = 0x2000, scoped, tag = 'output window, operand 0']
    loop: start=0, step=1, limit=5
    $region2: #{grouped_linear_forward.1} parent=1 // loop_pre_header
      _
    $region3: #{grouped_linear_forward.1} parent=1 // loop_header
      %s9 = sphi 0, %s13
      %p10 = scmp.ge.s32.totalorder %s9, 5
      %s16 = sphi 0, %s28
      %s17 = sphi 0, %s24
      %s18 = sphi 0, %s16
      %s19 = sphi 0, %s17
      %s20 = sphi 0, %s18
      %s21 = sphi 0, %s19
      %s33 = sphi 0, %s35
      %s36 = sphi 0, %s33
      %s37 = sphi 0, %s36
      %s53 = sphi 0, %s37
      %s59 = sphi 0, %s61
      %s62 = sphi 0, %s59
      %s63 = sphi 0, %s62
      %s79 = sphi 0, %s63
      %s85 = sphi 0, %s87
      %s88 = sphi 0, %s85
      %s89 = sphi 0, %s88
      %s105 = sphi 0, %s89
      %s113 = sphi 0, %s115
      %s116 = sphi 0, %s113
      %s117 = sphi 0, %s116
      %s133 = sphi 0, %s117
    $region4: #{grouped_linear_forward.1} parent=1 // loop_header_branch
      %12 = sbr.rel (%p10) target = $region8
    $region5: #{grouped_linear_forward.1} parent=1 // loop_body
      %s14 = ssub.s32 %s9, 1
      %s15 = ssub.s32 %s9, 2
      %s22 = sadd.s32 1, %s17
      %p23 = scmp.ge.s32.totalorder %s22, 1
      %s24 = scalar_select %p23, 0, %s22
      %s25 = sadd.s32 1, %s16
      %s26 = scalar_select %p23, %s25, %s16
      %p27 = scmp.ge.s32.totalorder %s26, 3
      %s28 = scalar_select %p27, 0, %s26
      %s29 = ssub.s32 %s17, %s24
      %s30 = ssub.s32 %s16, %s28
      %s31 = sor.u32 %s29, %s30
      %p32 = scmp.eq.s32.totalorder %s31, 0
      %s34 = sadd.s32 %s33, 1
      %s35 = scalar_select %p32, %s33, %s34
      %p38 = pneg %p32
      %p39 = scmp.eq.s32.totalorder %s9, 2
      %p40 = por %p38, %p39
      %p41 = scmp.ne.s32.totalorder %s33, %s36
      %p42 = scmp.eq.s32.totalorder %s9, 0
      %p43 = por %p41, %p42
      %p44 = scmp.ne.s32.totalorder %s33, %s36
      %p45 = scmp.eq.s32.totalorder %s14, 2
      %p46 = por %p44, %p45
      %p47 = scmp.ne.s32.totalorder %s36, %s37
      %p48 = scmp.eq.s32.totalorder %s14, 0
      %p49 = por %p47, %p48
      %p50 = scmp.ne.s32.totalorder %s36, %s37
      %p51 = scmp.eq.s32.totalorder %s15, 2
      %p52 = por %p50, %p51
      %p54 = scmp.ne.s32.totalorder %s37, %s53
      %p55 = scmp.eq.s32.totalorder %s15, 0
      %p56 = por %p54, %p55
      %s57 = ssub.s32 %s16, %s28
      %p58 = scmp.eq.s32.totalorder %s57, 0
      %s60 = sadd.s32 %s59, 1
      %s61 = scalar_select %p58, %s59, %s60
      %p64 = pneg %p58
      %p65 = scmp.eq.s32.totalorder %s9, 2
      %p66 = por %p64, %p65
      %p67 = scmp.ne.s32.totalorder %s59, %s62
      %p68 = scmp.eq.s32.totalorder %s9, 0
      %p69 = por %p67, %p68
      %p70 = scmp.ne.s32.totalorder %s59, %s62
      %p71 = scmp.eq.s32.totalorder %s14, 2
      %p72 = por %p70, %p71
      %p73 = scmp.ne.s32.totalorder %s62, %s63
      %p74 = scmp.eq.s32.totalorder %s14, 0
      %p75 = por %p73, %p74
      %p76 = scmp.ne.s32.totalorder %s62, %s63
      %p77 = scmp.eq.s32.totalorder %s15, 2
      %p78 = por %p76, %p77
      %p80 = scmp.ne.s32.totalorder %s63, %s79
      %p81 = scmp.eq.s32.totalorder %s15, 0
      %p82 = por %p80, %p81
      %s83 = ssub.s32 %s16, %s28
      %p84 = scmp.eq.s32.totalorder %s83, 0
      %s86 = sadd.s32 %s85, 1
      %s87 = scalar_select %p84, %s85, %s86
      %p90 = pneg %p84
      %p91 = scmp.eq.s32.totalorder %s9, 2
      %p92 = por %p90, %p91
      %p93 = scmp.ne.s32.totalorder %s85, %s88
      %p94 = scmp.eq.s32.totalorder %s9, 0
      %p95 = por %p93, %p94
      %p96 = scmp.ne.s32.totalorder %s85, %s88
      %p97 = scmp.eq.s32.totalorder %s14, 2
      %p98 = por %p96, %p97
      %p99 = scmp.ne.s32.totalorder %s88, %s89
      %p100 = scmp.eq.s32.totalorder %s14, 0
      %p101 = por %p99, %p100
      %p102 = scmp.ne.s32.totalorder %s88, %s89
      %p103 = scmp.eq.s32.totalorder %s15, 2
      %p104 = por %p102, %p103
      %p106 = scmp.ne.s32.totalorder %s89, %s105
      %p107 = scmp.eq.s32.totalorder %s15, 0
      %p108 = por %p106, %p107
      %s109 = ssub.s32 %s17, %s24
      %s110 = ssub.s32 %s16, %s28
      %s111 = sor.u32 %s109, %s110
      %p112 = scmp.eq.s32.totalorder %s111, 0
      %s114 = sadd.s32 %s113, 1
      %s115 = scalar_select %p112, %s113, %s114
      %p118 = pneg %p112
      %p119 = scmp.eq.s32.totalorder %s9, 2
      %p120 = por %p118, %p119
      %p121 = scmp.ne.s32.totalorder %s113, %s116
      %p122 = scmp.eq.s32.totalorder %s9, 0
      %p123 = por %p121, %p122
      %p124 = scmp.ne.s32.totalorder %s113, %s116
      %p125 = scmp.eq.s32.totalorder %s14, 2
      %p126 = por %p124, %p125
      %p127 = scmp.ne.s32.totalorder %s116, %s117
      %p128 = scmp.eq.s32.totalorder %s14, 0
      %p129 = por %p127, %p128
      %p130 = scmp.ne.s32.totalorder %s116, %s117
      %p131 = scmp.eq.s32.totalorder %s15, 2
      %p132 = por %p130, %p131
      %p134 = scmp.ne.s32.totalorder %s117, %s133
      %p135 = scmp.eq.s32.totalorder %s15, 0
      %p136 = por %p134, %p135
      %p137 = scmp.le.s32.totalorder 1, %s9
      %p138 = scmp.lt.s32.totalorder %s9, 4
      %p139 = pnand %p137, %p138
      %p140 = pneg %p139
      // Predicated region
      $region9: #{grouped_linear_forward.1} parent=5 // pred_check
        _
      $region10: #{grouped_linear_forward.1} parent=5 // pred_check_branch
        %142 = sbr.rel (%p139) target = $region12
      $region11: #{grouped_linear_forward.1} parent=5 // pred_region
        %s143 = ssub.s32 %s9, 1
      $region12: #{grouped_linear_forward.1} parent=5 // pred_fallthru
        _
      %p144 = scmp.lt.s32.totalorder %s9, 3
      // Predicated region
      $region13: #{grouped_linear_forward.1} parent=5 // pred_check
        %p145 = pneg %p144
      $region14: #{grouped_linear_forward.1} parent=5 // pred_check_branch
        %147 = sbr.rel (%p145) target = $region16
      $region15: #{grouped_linear_forward.1} parent=5 // pred_region
        // Predicated region
        $region17: #{grouped_linear_forward.1} parent=15 // pred_check
          %p148 = pneg %p43
        $region18: #{grouped_linear_forward.1} parent=15 // pred_check_branch
          %150 = sbr.rel (%p148) target = $region20
        $region19: #{grouped_linear_forward.1} parent=15 // pred_region
          %s151 = sand.u32 %s33, 1
          %s152 = sand.u32 %s33, 1
          %s153 = smul.addr %s152, 8
          %s154 = scalar_lea.vmem [#allocation2], %s153
          %s155 = smul.u32 2, %s17
          %s156 = ssub.s32 1, %s155
          %s157 = smul.u32 4, %s156
          %p158 = scmp.ne.s32.totalorder 0, %s157
          %s159 = smul.addr %s155, 3
          %s160 = sadd.s32 %s16, %s159
          %s161 = smul.addr %s160, 4
          %s162 = scalar_lea.vmem %s0, %s161
          // Predicated region
          $region21: #{grouped_linear_forward.1} parent=19 // pred_check
            %p163 = pneg %p158
          $region22: #{grouped_linear_forward.1} parent=19 // pred_check_branch
            %165 = sbr.rel (%p163) target = $region24
          $region23: #{grouped_linear_forward.1} parent=19 // pred_region
            // Predicated region
            $region25: #{grouped_linear_forward.1} parent=23 // pred_check
              _
            $region26: #{grouped_linear_forward.1} parent=23 // pred_check_branch
              %167 = sbr.rel target = $region28
            $region27: #{grouped_linear_forward.1} parent=23 // pred_region
              // Predicated region
              $region40: #{grouped_linear_forward.1} parent=27 // pred_check
                _
              $region41: #{grouped_linear_forward.1} parent=27 // pred_check_branch
                %191 = sbr.rel (0) target = $region43
              $region42: #{grouped_linear_forward.1} parent=27 // pred_region
                %s193 = ssub.s32 16, 1
                // While loop
                $region44: #{grouped_linear_forward.1} parent=42 // loop_pre_header
                  _
                $region45: #{grouped_linear_forward.1} parent=42 // loop_header
                  %s195 = sphi 0, %s197
                  %p196 = scmp.ge.s32.totalorder %s195, %s156
                  %s200 = sphi 0, %s207
                  %s201 = sphi %s162, %s210
                  %s202 = sphi %s154, %s211
                $region46: #{grouped_linear_forward.1} parent=42 // loop_header_branch
                  %199 = sbr.rel (%p196) target = $region50
                $region47: #{grouped_linear_forward.1} parent=42 // loop_body
                  %v203 = vld [vmem:[%s201] sm:%s193]
                  %204 = vst [vmem:[%s202] sm:%s193] %v203
                  %s205 = sadd.s32 1, %s200
                  %p206 = scmp.ge.s32.totalorder %s205, %s156
                  %s207 = scalar_select %p206, 0, %s205
                  %s208 = smul.u32 %s207, 12
                  %s209 = smul.u32 %s207, 4
                  %s210 = scalar_lea.vmem %s162, %s208
                  %s211 = scalar_lea.vmem %s154, %s209 [#allocation2]
                $region48: #{grouped_linear_forward.1} parent=42 // loop_footer
                  %s197 = sadd.s32 %s195, 1
                $region49: #{grouped_linear_forward.1} parent=42 // loop_footer_branch
                  %194 = sbr.rel target = $region45
                $region50: #{grouped_linear_forward.1} parent=42 // loop_exit
                  _
              $region43: #{grouped_linear_forward.1} parent=27 // pred_fallthru
                _
            $region28: #{grouped_linear_forward.1} parent=23 // pred_fallthru
              _
            // Predicated region
            $region29: #{grouped_linear_forward.1} parent=23 // pred_check
              _
            $region30: #{grouped_linear_forward.1} parent=23 // pred_check_branch
              %169 = sbr.rel (0) target = $region32
            $region31: #{grouped_linear_forward.1} parent=23 // pred_region
              %s171 = ssub.s32 16, 1
              // While loop
              $region33: #{grouped_linear_forward.1} parent=31 // loop_pre_header
                _
              $region34: #{grouped_linear_forward.1} parent=31 // loop_header
                %s173 = sphi 0, %s175
                %p174 = scmp.ge.s32.totalorder %s173, %s156
                %s178 = sphi 0, %s185
                %s179 = sphi %s162, %s188
                %s180 = sphi %s154, %s189
              $region35: #{grouped_linear_forward.1} parent=31 // loop_header_branch
                %177 = sbr.rel (%p174) target = $region39
              $region36: #{grouped_linear_forward.1} parent=31 // loop_body
                %v181 = vld [vmem:[%s179] sm:%s171]
                %182 = vst [vmem:[%s180] sm:%s171] %v181
                %s183 = sadd.s32 1, %s178
                %p184 = scmp.ge.s32.totalorder %s183, %s156
                %s185 = scalar_select %p184, 0, %s183
                %s186 = smul.u32 %s185, 12
                %s187 = smul.u32 %s185, 4
                %s188 = scalar_lea.vmem %s162, %s186
                %s189 = scalar_lea.vmem %s154, %s187 [#allocation2]
              $region37: #{grouped_linear_forward.1} parent=31 // loop_footer
                %s175 = sadd.s32 %s173, 1
              $region38: #{grouped_linear_forward.1} parent=31 // loop_footer_branch
                %172 = sbr.rel target = $region34
              $region39: #{grouped_linear_forward.1} parent=31 // loop_exit
                _
            $region32: #{grouped_linear_forward.1} parent=23 // pred_fallthru
              _
          $region24: #{grouped_linear_forward.1} parent=19 // pred_fallthru
            _
          %212 = vnop
        $region20: #{grouped_linear_forward.1} parent=15 // pred_fallthru
          _
        // Predicated region
        $region51: #{grouped_linear_forward.1} parent=15 // pred_check
          %p213 = pneg %p69
        $region52: #{grouped_linear_forward.1} parent=15 // pred_check_branch
          %215 = sbr.rel (%p213) target = $region54
        $region53: #{grouped_linear_forward.1} parent=15 // pred_region
          %p216 = scmp.lt.s32.totalorder %s16, 2
          %s217 = scalar_select %p216, %s16, 2
          %s218 = smul.addr %s217, 16
          %s219 = smul.addr %s218, 8
          %s220 = scalar_lea.vmem %s1, %s219
        $region54: #{grouped_linear_forward.1} parent=15 // pred_fallthru
          _
        // Predicated region
        $region55: #{grouped_linear_forward.1} parent=15 // pred_check
          %p221 = pneg %p95
        $region56: #{grouped_linear_forward.1} parent=15 // pred_check_branch
          %223 = sbr.rel (%p221) target = $region58
        $region57: #{grouped_linear_forward.1} parent=15 // pred_region
          %p224 = scmp.lt.s32.totalorder %s16, 2
          %s225 = scalar_select %p224, %s16, 2
          %s226 = scalar_lea.vmem %s2, %s225
        $region58: #{grouped_linear_forward.1} parent=15 // pred_fallthru
          _
      $region16: #{grouped_linear_forward.1} parent=5 // pred_fallthru
        _
      %p227 = scmp.le.s32.totalorder 1, %s9
      %p228 = scmp.lt.s32.totalorder %s9, 4
      %p229 = pnand %p227, %p228
      %p230 = pneg %p229
      // Predicated region
      $region59: #{grouped_linear_forward.1} parent=5 // pred_check
        _
      $region60: #{grouped_linear_forward.1} parent=5 // pred_check_branch
        %232 = sbr.rel (%p229) target = $region62
      $region61: #{grouped_linear_forward.1} parent=5 // pred_region
        %s233 = ssub.s32 %s9, 1
        %s234 = sand.u32 %s36, 1
        %s235 = sand.u32 %s36, 1
        %s236 = smul.addr %s235, 8
        %s237 = scalar_lea.vmem [#allocation2], %s236
        // Predicated region
        $region63: #{grouped_linear_forward.1} parent=61 // pred_check
          %p238 = pneg %p49
        $region64: #{grouped_linear_forward.1} parent=61 // pred_check_branch
          %240 = sbr.rel (%p238) target = $region66
        $region65: #{grouped_linear_forward.1} parent=61 // pred_region
          _
        $region66: #{grouped_linear_forward.1} parent=61 // pred_fallthru
          _
        %s241 = sand.u32 %s36, 1
        %s242 = sand.u32 %s36, 1
        %s243 = smul.addr %s242, 8
        %s244 = scalar_lea.vmem [#allocation2], %s243
        %p245 = pneg %p49
        %p246 = pneg %p46
        %p247 = scmp.lt.s32.totalorder %s18, 2
        %s248 = scalar_select %p247, %s18, 2
        %s249 = smul.addr %s248, 16
        %s250 = smul.addr %s249, 8
        %s251 = scalar_lea.vmem %s1, %s250
        %p252 = pneg %p75
        %p253 = pneg %p72
        %p254 = scmp.lt.s32.totalorder %s18, 2
        %s255 = scalar_select %p254, %s18, 2
        %s256 = scalar_lea.vmem %s2, %s255
        %p257 = pneg %p101
        %p258 = pneg %p98
        %p259 = pneg %p129
        %p260 = pneg %p126
        %s261 = sand.u32 %s116, 1
        %s262 = sand.u32 %s116, 1
        %s263 = smul.addr %s262, 8
        %s264 = scalar_lea.vmem [#allocation3], %s263
        %s265 = smul.u32 2, %s19
        %s266 = ssub.s32 1, %s265
        %s267 = smul.u32 4, %s266
        %p268 = scmp.lt.s32.totalorder %s18, 2
        %s269 = scalar_select %p268, %s18, 2
        %s270 = smul.addr %s269, 16
        %s271 = smul.addr %s270, 8
        %s272 = scalar_lea.vmem %s1, %s271
        %p273 = scmp.lt.s32.totalorder %s18, 2
        %s274 = scalar_select %p273, %s18, 2
        %s275 = scalar_lea.vmem %s2, %s274
        %s276 = smul.u32 2, %s19
        %s277 = ssub.s32 1, %s276
        %s278 = smul.u32 4, %s277
        %v279 = vld [vmem:[%s237] sm:$0xff]
        %v280 = vld [vmem:[%s272] sm:$0xff]
        %v281 = vld [vmem:[%s272 + $0x8] sm:$0xff]
        %v282 = vld [vmem:[%s272 + $0x10] sm:$0xff]
        %v283 = vld [vmem:[%s272 + $0x18] sm:$0xff]
        %v284 = vld [vmem:[%s272 + $0x20] sm:$0xff]
        %v285 = vld [vmem:[%s272 + $0x28] sm:$0xff]
        %v286 = vld [vmem:[%s272 + $0x30] sm:$0xff]
        %v287 = vld [vmem:[%s272 + $0x38] sm:$0xff]
        %v288 = vld [vmem:[%s272 + $0x40] sm:$0xff]
        %v289 = vld [vmem:[%s272 + $0x48] sm:$0xff]
        %v290 = vld [vmem:[%s272 + $0x50] sm:$0xff]
        %v291 = vld [vmem:[%s272 + $0x58] sm:$0xff]
        %v292 = vld [vmem:[%s272 + $0x60] sm:$0xff]
        %v293 = vld [vmem:[%s272 + $0x68] sm:$0xff]
        %v294 = vld [vmem:[%s272 + $0x70] sm:$0xff]
        %v295 = vld [vmem:[%s272 + $0x78] sm:$0xff]
        %v296 = vld [vmem:[%s275] sm:$0x1]
        %v298 = vperm.slane %v296, 0
        %300 = vmatpush.msra.mxu0 %v295
        %301 = vmatpush.msra.mxu0 %v294
        %302 = vmatpush.msra.mxu0 %v293
        %303 = vmatpush.msra.mxu0 %v292
        %304 = vmatpush.msra.mxu0 %v291
        %305 = vmatpush.msra.mxu0 %v290
        %306 = vmatpush.msra.mxu0 %v289
        %307 = vmatpush.msra.mxu0 %v288
        %308 = vmatpush.msra.mxu0 %v287
        %309 = vmatpush.msra.mxu0 %v286
        %310 = vmatpush.msra.mxu0 %v285
        %311 = vmatpush.msra.mxu0 %v284
        %312 = vmatpush.msra.mxu0 %v283
        %313 = vmatpush.msra.mxu0 %v282
        %314 = vmatpush.msra.mxu0 %v281
        %315 = vmatpush.msra.mxu0 %v280
        %316 = vmatmul.f32.gmra.mxu0 %v279
        %v317 = vpop.f32.mrf.mxu0
        %v318 = vadd.f32 %v298, %v317
        %319 = vdwg.mxu0
        %320 = vst [vmem:[%s264] sm:$0xff] %v318
        %s321 = sand.u32 %s116, 1
        %s322 = sand.u32 %s116, 1
        %s323 = smul.addr %s322, 8
        %s324 = scalar_lea.vmem [#allocation3], %s323
        // Predicated region
        $region67: #{grouped_linear_forward.1} parent=61 // pred_check
          %p325 = pneg %p126
        $region68: #{grouped_linear_forward.1} parent=61 // pred_check_branch
          %327 = sbr.rel (%p325) target = $region70
        $region69: #{grouped_linear_forward.1} parent=61 // pred_region
          %s328 = smul.u32 2, %s19
          %s329 = ssub.s32 1, %s328
          %s330 = smul.u32 4, %s329
          %p331 = scmp.ne.s32.totalorder 0, %s330
          %s332 = smul.addr %s328, 3
          %s333 = sadd.s32 %s18, %s332
          %s334 = smul.addr %s333, 4
          %s335 = scalar_lea.vmem %s3, %s334
          // Predicated region
          $region71: #{grouped_linear_forward.1} parent=69 // pred_check
            %p336 = pneg %p331
          $region72: #{grouped_linear_forward.1} parent=69 // pred_check_branch
            %338 = sbr.rel (%p336) target = $region74
          $region73: #{grouped_linear_forward.1} parent=69 // pred_region
            // Predicated region
            $region75: #{grouped_linear_forward.1} parent=73 // pred_check
              _
            $region76: #{grouped_linear_forward.1} parent=73 // pred_check_branch
              %340 = sbr.rel target = $region78
            $region77: #{grouped_linear_forward.1} parent=73 // pred_region
              // Predicated region
              $region90: #{grouped_linear_forward.1} parent=77 // pred_check
                _
              $region91: #{grouped_linear_forward.1} parent=77 // pred_check_branch
                %364 = sbr.rel (0) target = $region93
              $region92: #{grouped_linear_forward.1} parent=77 // pred_region
                %s366 = ssub.s32 16, 1
                // While loop
                $region94: #{grouped_linear_forward.1} parent=92 // loop_pre_header
                  _
                $region95: #{grouped_linear_forward.1} parent=92 // loop_header
                  %s368 = sphi 0, %s370
                  %p369 = scmp.ge.s32.totalorder %s368, %s329
                  %s373 = sphi 0, %s380
                  %s374 = sphi %s324, %s383
                  %s375 = sphi %s335, %s384
                $region96: #{grouped_linear_forward.1} parent=92 // loop_header_branch
                  %372 = sbr.rel (%p369) target = $region100
                $region97: #{grouped_linear_forward.1} parent=92 // loop_body
                  %v376 = vld [vmem:[%s374] sm:%s366]
                  %377 = vst [vmem:[%s375] sm:%s366] %v376
                  %s378 = sadd.s32 1, %s373
                  %p379 = scmp.ge.s32.totalorder %s378, %s329
                  %s380 = scalar_select %p379, 0, %s378
                  %s381 = smul.u32 %s380, 4
                  %s382 = smul.u32 %s380, 12
                  %s383 = scalar_lea.vmem %s324, %s381 [#allocation3]
                  %s384 = scalar_lea.vmem %s335, %s382
                $region98: #{grouped_linear_forward.1} parent=92 // loop_footer
                  %s370 = sadd.s32 %s368, 1
                $region99: #{grouped_linear_forward.1} parent=92 // loop_footer_branch
                  %367 = sbr.rel target = $region95
                $region100: #{grouped_linear_forward.1} parent=92 // loop_exit
                  _
              $region93: #{grouped_linear_forward.1} parent=77 // pred_fallthru
                _
            $region78: #{grouped_linear_forward.1} parent=73 // pred_fallthru
              _
            // Predicated region
            $region79: #{grouped_linear_forward.1} parent=73 // pred_check
              _
            $region80: #{grouped_linear_forward.1} parent=73 // pred_check_branch
              %342 = sbr.rel (0) target = $region82
            $region81: #{grouped_linear_forward.1} parent=73 // pred_region
              %s344 = ssub.s32 16, 1
              // While loop
              $region83: #{grouped_linear_forward.1} parent=81 // loop_pre_header
                _
              $region84: #{grouped_linear_forward.1} parent=81 // loop_header
                %s346 = sphi 0, %s348
                %p347 = scmp.ge.s32.totalorder %s346, %s329
                %s351 = sphi 0, %s358
                %s352 = sphi %s324, %s361
                %s353 = sphi %s335, %s362
              $region85: #{grouped_linear_forward.1} parent=81 // loop_header_branch
                %350 = sbr.rel (%p347) target = $region89
              $region86: #{grouped_linear_forward.1} parent=81 // loop_body
                %v354 = vld [vmem:[%s352] sm:%s344]
                %355 = vst [vmem:[%s353] sm:%s344] %v354
                %s356 = sadd.s32 1, %s351
                %p357 = scmp.ge.s32.totalorder %s356, %s329
                %s358 = scalar_select %p357, 0, %s356
                %s359 = smul.u32 %s358, 4
                %s360 = smul.u32 %s358, 12
                %s361 = scalar_lea.vmem %s324, %s359 [#allocation3]
                %s362 = scalar_lea.vmem %s335, %s360
              $region87: #{grouped_linear_forward.1} parent=81 // loop_footer
                %s348 = sadd.s32 %s346, 1
              $region88: #{grouped_linear_forward.1} parent=81 // loop_footer_branch
                %345 = sbr.rel target = $region84
              $region89: #{grouped_linear_forward.1} parent=81 // loop_exit
                _
            $region82: #{grouped_linear_forward.1} parent=73 // pred_fallthru
              _
          $region74: #{grouped_linear_forward.1} parent=69 // pred_fallthru
            _
          %385 = vnop
        $region70: #{grouped_linear_forward.1} parent=61 // pred_fallthru
          _
      $region62: #{grouped_linear_forward.1} parent=5 // pred_fallthru
        _
      %p386 = scmp.le.s32.totalorder 2, %s9
      // Predicated region
      $region101: #{grouped_linear_forward.1} parent=5 // pred_check
        %p387 = pneg %p386
      $region102: #{grouped_linear_forward.1} parent=5 // pred_check_branch
        %389 = sbr.rel (%p387) target = $region104
      $region103: #{grouped_linear_forward.1} parent=5 // pred_region
        %s390 = ssub.s32 %s9, 2
        // Predicated region
        $region105: #{grouped_linear_forward.1} parent=103 // pred_check
          %p391 = pneg %p132
        $region106: #{grouped_linear_forward.1} parent=103 // pred_check_branch
          %393 = sbr.rel (%p391) target = $region108
        $region107: #{grouped_linear_forward.1} parent=103 // pred_region
          %s394 = sand.u32 %s117, 1
          %s395 = sand.u32 %s117, 1
          %s396 = smul.addr %s395, 8
          %s397 = scalar_lea.vmem [#allocation3], %s396
        $region108: #{grouped_linear_forward.1} parent=103 // pred_fallthru
          _
      $region104: #{grouped_linear_forward.1} parent=5 // pred_fallthru
        _
    $region6: #{grouped_linear_forward.1} parent=1 // loop_footer
      %s13 = sadd.s32 1, %s9
    $region7: #{grouped_linear_forward.1} parent=1 // loop_footer_branch
      %8 = sbr.rel target = $region3
    $region8: #{grouped_linear_forward.1} parent=1 // loop_exit
      _

</llo_original>
